<compile_context>
chip_gen: v5e
topology: v5e:2x2
jax: 0.10.0
libtpu: 0.0.40
codegen_flags: <defaults>
</compile_context>

<pallas_src>
import functools

import jax
import jax.numpy as jnp
from jax import lax
from jax.experimental import pallas as pl
from jax.experimental.pallas import tpu as pltpu


def _round_up(x, m):
    return ((x + m - 1) // m) * m


def _fasttext_kernel(ids_ref, table_ref, w_ref, b_ref, out_ref, acc_ref, *,
                     seq_len, batch_padded, batch_tile, inv_seq_len,
                     use_mxu, seq_unroll):
    """Fused gather + mean-pool + linear.  grid = (batch_tiles,).

    ids_ref  : [S * Bp] int32  (SMEM, scalar-prefetched, row-major [S, Bp])
    table_ref: [Vp, Dp]        (VMEM-resident embedding table)
    w_ref    : [1, Dp]  (VPU path, output_dim == 1)  or  [Dp, Op] (MXU path)
    b_ref    : [1, 1]   (VPU path)                   or  [1, Op]
    out_ref  : [TB, O_out] f32
    acc_ref  : [TB, Dp] f32 scratch (pooled-sum tile)
    """
    b0 = pl.program_id(0) * batch_tile
    dp = table_ref.shape[1]

    # One batch row at a time: gather + accumulate its seq_len embedding rows
    # with an in-register f32 carry, then write the row into the acc tile.
    @pl.loop(0, batch_tile)
    def _row(b_local):
        def seq_body(_, carry):
            idx, acc_row = carry
            tok = ids_ref[idx]                              # scalar id (SMEM)
            row = table_ref[pl.ds(tok, 1), :]               # [1, Dp] gather
            return idx + batch_padded, acc_row + row.astype(jnp.float32)

        _, acc_row = lax.fori_loop(
            0, seq_len, seq_body,
            (b0 + b_local, jnp.zeros((1, dp), jnp.float32)),
            unroll=seq_unroll)
        acc_ref[pl.ds(b_local, 1), :] = acc_row

    pooled = acc_ref[...] * inv_seq_len                      # [TB, Dp] f32
    if use_mxu:
        out_ref[...] = jnp.dot(pooled, w_ref[...],
                               preferred_element_type=jnp.float32) + b_ref[...]
    else:
        # output_dim == 1: VPU broadcast-multiply + lane reduction (the MXU
        # would be <1% utilized for [TB,D]x[D,1]).  Lane-dense store:
        # replicate across 128 output lanes; the wrapper slices column 0.
        val = jnp.sum(pooled * w_ref[...], axis=-1, keepdims=True) + b_ref[...]
        out_ref[...] = jnp.broadcast_to(val, out_ref.shape)


def prepare_fasttext(embedding_table, fc_w, fc_b, *,
                     table_budget_bytes=40 << 20):
    """One-time parameter packing (hoisted out of the per-call forward).

    embedding_table: [vocab, emb_dim] f32
    fc_w:            [emb_dim, output_dim] f32
    fc_b:            [output_dim] f32
    """
    V, D = embedding_table.shape
    D_out = fc_w.shape[1]
    Dp = _round_up(D, 128)                    # lane-dense embedding dim
    Vp = _round_up(V, 8)                      # sublane-aligned vocab dim

    # Resident-table dtype: f32 when 2x (double-buffered BlockSpec) fits the
    # table budget -> bit-exact vs. the f32 module; bf16 otherwise.
    # TODO(synk): vocabs too large even for a bf16-resident table need an
    # HBM-resident table + manual per-row DMA gather (memory_space=pl.ANY).
    if 2 * Vp * Dp * 4 <= table_budget_bytes:
        table_dtype = jnp.float32
    else:
        table_dtype = jnp.bfloat16
    table = jnp.zeros((Vp, Dp), table_dtype)
    table = table.at[:V, :D].set(embedding_table.astype(table_dtype))

    use_mxu = D_out > 1
    if use_mxu:
        Op = _round_up(D_out, 128)
        w_in = jnp.zeros((Dp, Op), jnp.float32).at[:D, :D_out].set(
            fc_w.astype(jnp.float32))
        b_in = jnp.zeros((1, Op), jnp.float32).at[0, :D_out].set(
            fc_b.astype(jnp.float32))
        o_out = Op
    else:
        w_in = jnp.zeros((1, Dp), jnp.float32).at[0, :D].set(
            fc_w[:, 0].astype(jnp.float32))
        b_in = fc_b.astype(jnp.float32).reshape(1, 1)
        o_out = 128          # lane-dense replicated output; wrapper slices col 0

    return dict(table=table, w=w_in, b=b_in, out_dim=D_out,
                Dp=Dp, Vp=Vp, o_out=o_out, use_mxu=use_mxu)


def fasttext_forward(text, params):
    """text: [seq_len, batch] int token ids -> [batch, output_dim] f32."""
    S, B = text.shape
    Dp, Vp = params["Dp"], params["Vp"]
    O, o_out = params["out_dim"], params["o_out"]
    use_mxu = params["use_mxu"]
    table, w_in, b_in = params["table"], params["w"], params["b"]

    # ---- batch tiling (v7x-aware: split the single "parallel" grid axis so
    # both TensorCores get work whenever the padded batch allows) -----------
    Bp8 = _round_up(B, 8)
    if Bp8 <= 8:
        TB = 8
    elif Bp8 <= 256:
        TB = _round_up((Bp8 + 1) // 2, 8)      # >= 2 batch tiles
    else:
        TB = 128
    Bp = _round_up(Bp8, TB)

    # ---- token ids: pad batch, flatten to 1-D for SMEM scalar prefetch ----
    # (1-D avoids the 2-D SMEM [R,C] -> [ceil(R/8)*8, ceil(C/128)*128] pad
    # blowup when the batch is small.)
    # TODO(synk): for very large S*B the id array should be streamed as
    # per-step SMEM blocks instead of one scalar-prefetch array.
    ids = text.astype(jnp.int32)
    if Bp != B:
        ids = jnp.pad(ids, ((0, 0), (0, Bp - B)))   # padded cols read row 0
    ids_flat = ids.reshape(-1)                      # [S * Bp], row-major [S, Bp]

    # ---- VMEM budget (v7x 64 MiB physical; table block is double-buffered)
    table_bytes = table.size * table.dtype.itemsize
    vmem_bytes = (2 * table_bytes
                  + TB * Dp * 4                     # acc scratch
                  + 2 * TB * o_out * 4              # output block
                  + 2 * (w_in.size + b_in.size) * 4
                  + (2 << 20))                      # slack
    vmem_limit = int(min(max(vmem_bytes, 8 << 20), 56 << 20))

    kernel = functools.partial(
        _fasttext_kernel,
        seq_len=S, batch_padded=Bp, batch_tile=TB, inv_seq_len=1.0 / S,
        use_mxu=use_mxu, seq_unroll=min(8, S))

    out = pl.pallas_call(
        kernel,
        out_shape=jax.ShapeDtypeStruct((Bp, o_out), jnp.float32),
        grid_spec=pltpu.PrefetchScalarGridSpec(
            num_scalar_prefetch=1,
            grid=(Bp // TB,),
            in_specs=[
                pl.BlockSpec((Vp, Dp), lambda bt, ids: (0, 0)),  # resident table
                pl.BlockSpec(w_in.shape, lambda bt, ids: (0, 0)),
                pl.BlockSpec(b_in.shape, lambda bt, ids: (0, 0)),
            ],
            out_specs=pl.BlockSpec((TB, o_out), lambda bt, ids: (bt, 0)),
            scratch_shapes=[pltpu.VMEM((TB, Dp), jnp.float32)],
        ),
        compiler_params=pltpu.CompilerParams(
            dimension_semantics=("parallel",),
            vmem_limit_bytes=vmem_limit,
        ),
    )(ids_flat, table, w_in, b_in)

    return out[:B, :O]


def reference_forward(text, embedding_table, fc_w, fc_b):
    emb = jnp.take(embedding_table, text, axis=0)   # [S, B, D]
    pooled = jnp.mean(emb, axis=0)                  # [B, D]
    return pooled @ fc_w + fc_b


if __name__ == "__main__":
    # Small, deterministic shapes consistent with the module.
    vocab_size = 50
    embedding_dim = 32
    pad_idx = 1
    seq_len = 8
    batch = 2

    key = jax.random.PRNGKey(0)
    k_emb, k_w, k_b, k_txt, k_w2, k_b2 = jax.random.split(key, 6)

    embedding_table = jax.random.normal(
        k_emb, (vocab_size, embedding_dim), dtype=jnp.float32) * 0.1
    embedding_table = embedding_table.at[pad_idx].set(0.0)  # padding_idx row

    text = jax.random.randint(
        k_txt, (seq_len, batch), 0, vocab_size, dtype=jnp.int32)
    text = text.at[-2:].set(pad_idx)   # pad the tail like padded batches

    # --- binary-sentiment head (output_dim == 1, VPU projection path) ------
    fc_w = jax.random.normal(k_w, (embedding_dim, 1), dtype=jnp.float32) * 0.1
    fc_b = jax.random.normal(k_b, (1,), dtype=jnp.float32) * 0.1
    params = prepare_fasttext(embedding_table, fc_w, fc_b)
    out = jax.block_until_ready(fasttext_forward(text, params))
    ref = reference_forward(text, embedding_table, fc_w, fc_b)
    assert out.shape == (batch, 1)
    assert jnp.allclose(out, ref, atol=1e-5, rtol=1e-5), (out, ref)

    # --- multi-class head (output_dim > 1, MXU projection path) ------------
    fc_w4 = jax.random.normal(k_w2, (embedding_dim, 4), dtype=jnp.float32) * 0.1
    fc_b4 = jax.random.normal(k_b2, (4,), dtype=jnp.float32) * 0.1
    params4 = prepare_fasttext(embedding_table, fc_w4, fc_b4)
    out4 = jax.block_until_ready(fasttext_forward(text, params4))
    ref4 = reference_forward(text, embedding_table, fc_w4, fc_b4)
    assert out4.shape == (batch, 4)
    assert jnp.allclose(out4, ref4, atol=1e-5, rtol=1e-5), (out4, ref4)

    print("KERNEL_OK")
</pallas_src>

<mosaic_0001>
module attributes {stable_mosaic.version = 11 : i64} {
  func.func @_fasttext_kernel(%arg0: i32, %arg1: memref<64xi32, #tpu.memory_space<smem>>, %arg2: memref<56x128xf32, #tpu.memory_space<vmem>>, %arg3: memref<1x128xf32, #tpu.memory_space<vmem>>, %arg4: memref<1x1xf32, #tpu.memory_space<vmem>>, %arg5: memref<8x128xf32, #tpu.memory_space<vmem>>, %arg6: memref<8x128xf32, #tpu.memory_space<vmem>>) attributes {dimension_semantics = [#tpu.dimension_semantics<parallel>], iteration_bounds = array<i64: 1>, scalar_prefetch = 1 : i64, scratch_operands = 1 : i64, tpu.core_type = #tpu.core_type<tc>, window_params = [{pipeline_mode = #tpu.pipeline_mode<synchronous>, transform_indices = @transform_0, window_bounds = array<i64: 56, 128>}, {pipeline_mode = #tpu.pipeline_mode<synchronous>, transform_indices = @transform_1, window_bounds = array<i64: 1, 128>}, {pipeline_mode = #tpu.pipeline_mode<synchronous>, transform_indices = @transform_2, window_bounds = array<i64: 1, 1>}, {transform_indices = @transform_3, window_bounds = array<i64: 8, 128>}]} {
    %c8_i32 = arith.constant 8 : i32
    %0 = arith.muli %arg0, %c8_i32 : i32
    %c0_i32 = arith.constant 0 : i32
    %c8_i32_0 = arith.constant 8 : i32
    %1 = arith.addi %c0_i32, %c8_i32_0 : i32
    %c1_i32 = arith.constant 1 : i32
    scf.for %arg7 = %c0_i32 to %1 step %c1_i32  : i32 {
      %c1_i32_10 = arith.constant 1 : i32
      %16 = arith.muli %arg7, %c1_i32_10 : i32
      %c0_i32_11 = arith.constant 0 : i32
      %17 = arith.addi %c0_i32_11, %16 : i32
      %18 = arith.addi %0, %17 : i32
      %cst_12 = arith.constant 0.000000e+00 : f32
      %19 = vector.broadcast %cst_12 : f32 to vector<1x128xf32>
      %c0_i32_13 = arith.constant 0 : i32
      %20 = arith.index_cast %18 : i32 to index
      %21 = memref.load %arg1[%20] : memref<64xi32, #tpu.memory_space<smem>>
      %22 = arith.index_cast %21 : i32 to index
      %c0_14 = arith.constant 0 : index
      %23 = vector.load %arg2[%22, %c0_14] : memref<56x128xf32, #tpu.memory_space<vmem>>, vector<1x128xf32>
      %c8_i32_15 = arith.constant 8 : i32
      %24 = arith.addi %18, %c8_i32_15 : i32
      %25 = arith.addf %19, %23 : vector<1x128xf32>
      %c1_i32_16 = arith.constant 1 : i32
      %26 = arith.index_cast %24 : i32 to index
      %27 = memref.load %arg1[%26] : memref<64xi32, #tpu.memory_space<smem>>
      %28 = arith.index_cast %27 : i32 to index
      %c0_17 = arith.constant 0 : index
      %29 = vector.load %arg2[%28, %c0_17] : memref<56x128xf32, #tpu.memory_space<vmem>>, vector<1x128xf32>
      %c8_i32_18 = arith.constant 8 : i32
      %30 = arith.addi %24, %c8_i32_18 : i32
      %31 = arith.addf %25, %29 : vector<1x128xf32>
      %c2_i32 = arith.constant 2 : i32
      %32 = arith.index_cast %30 : i32 to index
      %33 = memref.load %arg1[%32] : memref<64xi32, #tpu.memory_space<smem>>
      %34 = arith.index_cast %33 : i32 to index
      %c0_19 = arith.constant 0 : index
      %35 = vector.load %arg2[%34, %c0_19] : memref<56x128xf32, #tpu.memory_space<vmem>>, vector<1x128xf32>
      %c8_i32_20 = arith.constant 8 : i32
      %36 = arith.addi %30, %c8_i32_20 : i32
      %37 = arith.addf %31, %35 : vector<1x128xf32>
      %c3_i32 = arith.constant 3 : i32
      %38 = arith.index_cast %36 : i32 to index
      %39 = memref.load %arg1[%38] : memref<64xi32, #tpu.memory_space<smem>>
      %40 = arith.index_cast %39 : i32 to index
      %c0_21 = arith.constant 0 : index
      %41 = vector.load %arg2[%40, %c0_21] : memref<56x128xf32, #tpu.memory_space<vmem>>, vector<1x128xf32>
      %c8_i32_22 = arith.constant 8 : i32
      %42 = arith.addi %36, %c8_i32_22 : i32
      %43 = arith.addf %37, %41 : vector<1x128xf32>
      %c4_i32 = arith.constant 4 : i32
      %44 = arith.index_cast %42 : i32 to index
      %45 = memref.load %arg1[%44] : memref<64xi32, #tpu.memory_space<smem>>
      %46 = arith.index_cast %45 : i32 to index
      %c0_23 = arith.constant 0 : index
      %47 = vector.load %arg2[%46, %c0_23] : memref<56x128xf32, #tpu.memory_space<vmem>>, vector<1x128xf32>
      %c8_i32_24 = arith.constant 8 : i32
      %48 = arith.addi %42, %c8_i32_24 : i32
      %49 = arith.addf %43, %47 : vector<1x128xf32>
      %c5_i32 = arith.constant 5 : i32
      %50 = arith.index_cast %48 : i32 to index
      %51 = memref.load %arg1[%50] : memref<64xi32, #tpu.memory_space<smem>>
      %52 = arith.index_cast %51 : i32 to index
      %c0_25 = arith.constant 0 : index
      %53 = vector.load %arg2[%52, %c0_25] : memref<56x128xf32, #tpu.memory_space<vmem>>, vector<1x128xf32>
      %c8_i32_26 = arith.constant 8 : i32
      %54 = arith.addi %48, %c8_i32_26 : i32
      %55 = arith.addf %49, %53 : vector<1x128xf32>
      %c6_i32 = arith.constant 6 : i32
      %56 = arith.index_cast %54 : i32 to index
      %57 = memref.load %arg1[%56] : memref<64xi32, #tpu.memory_space<smem>>
      %58 = arith.index_cast %57 : i32 to index
      %c0_27 = arith.constant 0 : index
      %59 = vector.load %arg2[%58, %c0_27] : memref<56x128xf32, #tpu.memory_space<vmem>>, vector<1x128xf32>
      %c8_i32_28 = arith.constant 8 : i32
      %60 = arith.addi %54, %c8_i32_28 : i32
      %61 = arith.addf %55, %59 : vector<1x128xf32>
      %c7_i32 = arith.constant 7 : i32
      %62 = arith.index_cast %60 : i32 to index
      %63 = memref.load %arg1[%62] : memref<64xi32, #tpu.memory_space<smem>>
      %64 = arith.index_cast %63 : i32 to index
      %c0_29 = arith.constant 0 : index
      %65 = vector.load %arg2[%64, %c0_29] : memref<56x128xf32, #tpu.memory_space<vmem>>, vector<1x128xf32>
      %c8_i32_30 = arith.constant 8 : i32
      %66 = arith.addi %60, %c8_i32_30 : i32
      %67 = arith.addf %61, %65 : vector<1x128xf32>
      %68 = arith.index_cast %17 : i32 to index
      %c0_31 = arith.constant 0 : index
      %69 = vector.load %arg6[%68, %c0_31] : memref<8x128xf32, #tpu.memory_space<vmem>>, vector<1x128xf32>
      tpu.vector_store %arg6[%68, %c0_31], %67 {strides = array<i32>} : memref<8x128xf32, #tpu.memory_space<vmem>>, vector<1x128xf32>,
    }
    %c8_i32_1 = arith.constant 8 : i32
    %c0 = arith.constant 0 : index
    %c0_2 = arith.constant 0 : index
    %2 = vector.load %arg6[%c0, %c0_2] : memref<8x128xf32, #tpu.memory_space<vmem>>, vector<8x128xf32>
    %cst = arith.constant 1.250000e-01 : f32
    %3 = vector.broadcast %cst : f32 to vector<8x128xf32>
    %4 = arith.mulf %2, %3 : vector<8x128xf32>
    %c0_3 = arith.constant 0 : index
    %c0_4 = arith.constant 0 : index
    %5 = vector.load %arg3[%c0_3, %c0_4] : memref<1x128xf32, #tpu.memory_space<vmem>>, vector<1x128xf32>
    %6 = vector.broadcast %5 : vector<1x128xf32> to vector<8x128xf32>
    %7 = arith.mulf %4, %6 : vector<8x128xf32>
    %cst_5 = arith.constant dense<0.000000e+00> : vector<8xf32>
    %8 = vector.multi_reduction <add>, %7, %cst_5 [1] : vector<8x128xf32> to vector<8xf32>
    %9 = vector.shape_cast %8 : vector<8xf32> to vector<8x1xf32>
    %c0_6 = arith.constant 0 : index
    %c0_7 = arith.constant 0 : index
    %10 = vector.load %arg4[%c0_6, %c0_7] : memref<1x1xf32, #tpu.memory_space<vmem>>, vector<1x1xf32>
    %11 = vector.broadcast %10 : vector<1x1xf32> to vector<8x1xf32>
    %12 = arith.addf %9, %11 : vector<8x1xf32>
    %13 = vector.shape_cast %12 : vector<8x1xf32> to vector<8x1xf32>
    %14 = vector.broadcast %13 : vector<8x1xf32> to vector<8x128xf32>
    %c0_8 = arith.constant 0 : index
    %c0_9 = arith.constant 0 : index
    %15 = vector.load %arg5[%c0_8, %c0_9] : memref<8x128xf32, #tpu.memory_space<vmem>>, vector<8x128xf32>
    tpu.vector_store %arg5[%c0_8, %c0_9], %14 {strides = array<i32>} : memref<8x128xf32, #tpu.memory_space<vmem>>, vector<8x128xf32>,
    return
  }
  func.func @transform_0(%arg0: i32, %arg1: memref<64xi32, #tpu.memory_space<smem>>) -> (i32, i32) {
    %c0_i32 = arith.constant 0 : i32
    %c0_i32_0 = arith.constant 0 : i32
    %c0_i32_1 = arith.constant 0 : i32
    return %c0_i32, %c0_i32_0 : i32, i32
  }
  func.func @transform_1(%arg0: i32, %arg1: memref<64xi32, #tpu.memory_space<smem>>) -> (i32, i32) {
    %c0_i32 = arith.constant 0 : i32
    %c0_i32_0 = arith.constant 0 : i32
    %c0_i32_1 = arith.constant 0 : i32
    return %c0_i32, %c0_i32_0 : i32, i32
  }
  func.func @transform_2(%arg0: i32, %arg1: memref<64xi32, #tpu.memory_space<smem>>) -> (i32, i32) {
    %c0_i32 = arith.constant 0 : i32
    %c0_i32_0 = arith.constant 0 : i32
    %c0_i32_1 = arith.constant 0 : i32
    return %c0_i32, %c0_i32_0 : i32, i32
  }
  func.func @transform_3(%arg0: i32, %arg1: memref<64xi32, #tpu.memory_space<smem>>) -> (i32, i32) {
    %c0_i32 = arith.constant 0 : i32
    %c0_i32_0 = arith.constant 0 : i32
    return %arg0, %c0_i32 : i32, i32
  }
}

</mosaic_0001>

<llo_original>
// kernel: tpu_custom_call.1
$region0: #{tpu_custom_call.1}
  #allocation0 [shape = 'u32[]', space=smem, size = 0x4, offset = 0x4, fixed_abs, tag = 'smem constant byte address 0x4 - core index']
  #allocation1 [shape = 'u32[72,128]{1,0:T(1,128)}', space=vmem, size = 0x9000, scoped, tag = 'internal scratch']
  #allocation2 [shape = 'f32[8,128]{1,0:T(8,128)}', space=vmem, size = 0x1000, scoped, tag = 'scratch operand']
  #allocation3 [shape = 's32[1]{0}', space=sflag, size = 0x4, scoped, tag = 'scoped memory for tpu_custom_call.1']
  #allocation4 [shape = 'u8[512]{0}', space=smem, size = 0x200, scoped, tag = 'prefetched SMEM operand 0']
  #allocation5 [shape = 'f32[1,1]{1,0:T(1,128)S(1)}', space=vmem, size = 0x200, scoped, tag = 'scoped memory for tpu_custom_call.1']
  %s0 = inlined_call_operand.vmem [shape: s32[64], index: 0, kind: input, shape index: {}]
  %s1 = inlined_call_operand.hbm [shape: f32[56,128], index: 1, kind: input, shape index: {}]
  %s2 = inlined_call_operand.vmem [shape: f32[1,128], index: 2, kind: input, shape index: {}]
  %s3 = inlined_call_operand.<no memory space> [shape: f32[1,1], index: 3, kind: input, shape index: {}]
  %s4 = inlined_call_operand.hbm [shape: f32[8,128], index: 4, kind: output, shape index: {}]
  %s5 = sld [smem:[#allocation0]]
  $region33: #{tpu_custom_call.1} parent=0
    _
  %s7 = ssub.s32 1, %s5
  %s8 = scalar_select 0, %s7, %s5
  %s10 = sshll.u32 %s0, 4
  %s11 = int_to_ptr.vmem [resolvable:$true] %s10
  %13 = dma.vmem_to_smem %s11, 16, [#allocation4], [#allocation3]
  %v14 = vstv %s3
  %15 = vst [vmem:[#allocation5] sm:$0x1] %v14
  %17 = dma.done [#allocation3], 16
  %18 = sfence
  $region1: #{tpu_custom_call.1} parent=0
    #allocation6 [shape = 'u8[28672]{0}', space=vmem, size = 0x7000, scoped, tag = 'input window, operand 1, single buffered']
    #allocation7 [shape = 's32[1]{0}', space=sflag, size = 0x4, scoped, tag = 'scoped memory for tpu_custom_call.1']
    #allocation8 [shape = 's32[1]{0}', space=sflag, size = 0x4, scoped, tag = 'scoped memory for tpu_custom_call.1']
    #allocation9 [shape = 'u8[4096]{0}', space=vmem, size = 0x1000, scoped, tag = 'output window, operand 0, single buffered']
    %19 = vsyncpa [#allocation7], 0
    %20 = vsyncpa [#allocation8], 0
    // Predicated region
    $region2: #{tpu_custom_call.1} parent=1 // pred_check
      _
    $region3: #{tpu_custom_call.1} parent=1 // pred_check_branch
      %22 = sbr.rel (0) target = $region5
    $region4: #{tpu_custom_call.1} parent=1 // pred_region
      %24 = vsyncadd [#allocation7], 0
      %s25 = sshll.u32 %s1, 4
      %s26 = int_to_ptr.hbm [resolvable:$true] %s25
      %s27 = sshll.u32 [#allocation6], 4
      %s28 = int_to_ptr.vmem [resolvable:$true] %s27
      %33 = dma.hbm_to_vmem [thread:$0]  %s26, 896, %s28, [#allocation7], 128, 128, 8
    $region5: #{tpu_custom_call.1} parent=1 // pred_fallthru
      _
    // Predicated region
    $region6: #{tpu_custom_call.1} parent=1 // pred_check
      _
    $region7: #{tpu_custom_call.1} parent=1 // pred_check_branch
      %35 = sbr.rel (0) target = $region9
    $region8: #{tpu_custom_call.1} parent=1 // pred_region
      _
    $region9: #{tpu_custom_call.1} parent=1 // pred_fallthru
      _
    // Predicated region
    $region10: #{tpu_custom_call.1} parent=1 // pred_check
      _
    $region11: #{tpu_custom_call.1} parent=1 // pred_check_branch
      %37 = sbr.rel (0) target = $region13
    $region12: #{tpu_custom_call.1} parent=1 // pred_region
      _
    $region13: #{tpu_custom_call.1} parent=1 // pred_fallthru
      _
    // Predicated region
    $region14: #{tpu_custom_call.1} parent=1 // pred_check
      _
    $region15: #{tpu_custom_call.1} parent=1 // pred_check_branch
      %39 = sbr.rel (0) target = $region17
    $region16: #{tpu_custom_call.1} parent=1 // pred_region
      %41 = dma.done [#allocation7], 896
    $region17: #{tpu_custom_call.1} parent=1 // pred_fallthru
      _
    %s42 = smul.u32 0, 8
    loop: start=0, step=1, limit=8
    $region18: #{tpu_custom_call.1} parent=1 // loop_pre_header
      _
    $region19: #{tpu_custom_call.1} parent=1 // loop_header
      %s44 = sphi 0, %s48
      %p45 = scmp.ge.s32.totalorder %s44, 8
    $region20: #{tpu_custom_call.1} parent=1 // loop_header_branch
      %47 = sbr.rel (%p45) target = $region24
    $region21: #{tpu_custom_call.1} parent=1 // loop_body
      %s49 = sadd.s32 %s42, %s44
      %s50 = sld [smem:[#allocation4 + %s49]]
      %s51 = scalar_lea.vmem [#allocation6], %s50
      %v52 = vld [vmem:[%s51] sm:$0x1]
      %s53 = sadd.s32 %s49, 8
      %v54 = vadd.f32 %v52, 0.0
      %s55 = sld [smem:[#allocation4 + %s53]]
      %s56 = scalar_lea.vmem [#allocation6], %s55
      %v57 = vld [vmem:[%s56] sm:$0x1]
      %s58 = sadd.s32 %s49, 16
      %v59 = vadd.f32 %v54, %v57
      %s60 = sld [smem:[#allocation4 + %s58]]
      %s61 = scalar_lea.vmem [#allocation6], %s60
      %v62 = vld [vmem:[%s61] sm:$0x1]
      %s63 = sadd.s32 %s49, 24
      %v64 = vadd.f32 %v59, %v62
      %s65 = sld [smem:[#allocation4 + %s63]]
      %s66 = scalar_lea.vmem [#allocation6], %s65
      %v67 = vld [vmem:[%s66] sm:$0x1]
      %s68 = sadd.s32 %s49, 32
      %v69 = vadd.f32 %v64, %v67
      %s70 = sld [smem:[#allocation4 + %s68]]
      %s71 = scalar_lea.vmem [#allocation6], %s70
      %v72 = vld [vmem:[%s71] sm:$0x1]
      %s73 = sadd.s32 %s49, 40
      %v74 = vadd.f32 %v69, %v72
      %s75 = sld [smem:[#allocation4 + %s73]]
      %s76 = scalar_lea.vmem [#allocation6], %s75
      %v77 = vld [vmem:[%s76] sm:$0x1]
      %s78 = sadd.s32 %s49, 48
      %v79 = vadd.f32 %v74, %v77
      %s80 = sld [smem:[#allocation4 + %s78]]
      %s81 = scalar_lea.vmem [#allocation6], %s80
      %v82 = vld [vmem:[%s81] sm:$0x1]
      %s83 = sadd.s32 %s49, 56
      %v84 = vadd.f32 %v79, %v82
      %s85 = sld [smem:[#allocation4 + %s83]]
      %s86 = scalar_lea.vmem [#allocation6], %s85
      %v87 = vld [vmem:[%s86] sm:$0x1]
      %v88 = vadd.f32 %v84, %v87
      %s89 = scalar_lea.vmem [#allocation2], %s44
      %90 = vst [vmem:[%s89] sm:$0x1] %v88
    $region22: #{tpu_custom_call.1} parent=1 // loop_footer
      %s48 = sadd.s32 1, %s44
    $region23: #{tpu_custom_call.1} parent=1 // loop_footer_branch
      %43 = sbr.rel target = $region19
    $region24: #{tpu_custom_call.1} parent=1 // loop_exit
      _
    %v91 = vld [vmem:[#allocation2] sm:$0xff]
    %v92 = vmul.f32 %v91, 0.125
    %v93 = vld [vmem:[%s2] sm:$0x1]
    %v95 = vperm.slane %v93, 0
    %v97 = vmul.f32 %v92, %v95
    %98 = vadd.xlane.f32.xlu0 %v97
    %v99 = vpop.xlane.xlu0 %98
    %v100 = vld [vmem:[#allocation5] sm:$0x1]
    %v102 = vperm.slane %v100, 0
    %v104 = vadd.f32 %v99, %v102
    %106 = vset.pattern.permute.xlu0 0
    %107 = vperm.xlu0 %106, %v104
    %v108 = vpop.permute.xlu0 %107
    %110 = vst [vmem:[#allocation9] sm:$0xff] %v108
    // Predicated region
    $region25: #{tpu_custom_call.1} parent=1 // pred_check
      _
    $region26: #{tpu_custom_call.1} parent=1 // pred_check_branch
      %112 = sbr.rel (0) target = $region28
    $region27: #{tpu_custom_call.1} parent=1 // pred_region
      %114 = vsyncadd [#allocation8], 0
      %s116 = sshll.u32 [#allocation9], 4
      %s117 = int_to_ptr.vmem [resolvable:$true] %s116
      %s118 = sshll.u32 %s4, 4
      %s119 = int_to_ptr.hbm [resolvable:$true] %s118
      %121 = dma.vmem_to_hbm [thread:$0]  %s117, 128, %s119, [#allocation8]
    $region28: #{tpu_custom_call.1} parent=1 // pred_fallthru
      _
    // Predicated region
    $region29: #{tpu_custom_call.1} parent=1 // pred_check
      _
    $region30: #{tpu_custom_call.1} parent=1 // pred_check_branch
      %123 = sbr.rel (0) target = $region32
    $region31: #{tpu_custom_call.1} parent=1 // pred_region
      %125 = dma.done [#allocation8], 128
    $region32: #{tpu_custom_call.1} parent=1 // pred_fallthru
      _
    %126 = vsyncpa [#allocation7], 1
    %127 = vsyncpa [#allocation8], 1

</llo_original>
